<compile_context>
chip_gen: v6e
topology: v6e:2x2x1
jax: 0.10.0
libtpu: 0.0.40
codegen_flags: <defaults>
</compile_context>

<pallas_src>
import functools

import jax
import jax.numpy as jnp
from jax.experimental import pallas as pl
from jax.experimental.pallas import tpu as pltpu

NUM_HIDDEN = 4  # encoder out channels


def unet_kernel(x_ref, w_enc_ref, b_enc_ref, w_dec_ref, b_dec_ref, o_ref, *, H, W):
    # x_ref / o_ref : (TN, H*W) float32, one flattened image per sublane row
    # w_enc_ref: SMEM (4*3*3,)   b_enc_ref: SMEM (4,)
    # w_dec_ref: SMEM (4*2*2,)   b_dec_ref: SMEM (1,)
    TN, HW = o_ref.shape
    x = x_ref[...]  # already f32 (cast in the wrapper)

    # ---- lane-only index / parity / validity masks: (1, HW), broadcast over TN ----
    flat = jax.lax.broadcasted_iota(jnp.int32, (1, HW), 1)
    if (W & (W - 1)) == 0:                        # power-of-two fast path (demo: 16)
        col = flat & (W - 1)
        row = flat >> (W.bit_length() - 1)
        y_odd = (flat & W) != 0                   # bit log2(W) of flat == (row & 1)
    else:
        col = flat % W
        row = flat // W
        y_odd = (row & 1) != 0
    x_odd = (flat & 1) != 0                       # W is even, so col parity == flat parity
    row_has_up = row >= 1                         # tap y-1 valid
    row_has_dn = row <= H - 2                     # tap y+1 valid
    col_has_lf = col >= 1                         # tap x-1 valid
    col_has_rt = col <= W - 2                     # tap x+1 valid
    # pre-ANDed corner masks: one select per corner tap instead of two
    m_ul = row_has_up & col_has_lf
    m_ur = row_has_up & col_has_rt
    m_dl = row_has_dn & col_has_lf
    m_dr = row_has_dn & col_has_rt
    tap_masks = (m_ul, row_has_up, m_ur,
                 col_has_lf, None, col_has_rt,
                 m_dl, row_has_dn, m_dr)

    # ---- the 9 conv taps, materialized exactly once (one XLU roll + one select) ----
    taps = []
    for kh in range(3):
        for kw in range(3):
            shift = (1 - kh) * W + (1 - kw)       # tap value x[y+kh-1, x+kw-1] -> (y, x)
            t = x if shift == 0 else pltpu.roll(x, shift=shift % HW, axis=1)
            m = tap_masks[kh * 3 + kw]
            if m is not None:                     # zero-pad semantics at the image border
                t = jnp.where(m, t, 0.0)
            taps.append(t)

    # ---- per hidden channel: one-shot conv -> ReLU -> MaxPool2d(2) -> ConvT(2,s=2) ----
    out = jnp.full((TN, HW), b_dec_ref[0], jnp.float32)   # deconv bias folded in
    for c in range(NUM_HIDDEN):
        # Conv2d(1->4): single accumulation chain, written once per channel
        conv = taps[0] * w_enc_ref[c * 9 + 0]
        for k in range(1, 9):
            conv = conv + taps[k] * w_enc_ref[c * 9 + k]
        h = jnp.maximum(conv + b_enc_ref[c], 0.0)

        # 2x2 max pool kept at full resolution: partner rows/cols via roll + parity mask
        up = pltpu.roll(h, shift=(HW - W) % HW, axis=1)    # value at y+1
        dn = pltpu.roll(h, shift=W % HW, axis=1)           # value at y-1
        rowmax = jnp.maximum(h, jnp.where(y_odd, dn, up))
        lf = pltpu.roll(rowmax, shift=HW - 1, axis=1)      # value at x+1
        rt = pltpu.roll(rowmax, shift=1, axis=1)           # value at x-1
        p = jnp.maximum(rowmax, jnp.where(x_odd, rt, lf))
        # p[y, x] == pooled_c[y // 2, x // 2]

        # ConvTranspose2d(k=2, s=2): weight selected by output parity, on (1, HW) only
        w00 = w_dec_ref[c * 4 + 0]
        w01 = w_dec_ref[c * 4 + 1]
        w10 = w_dec_ref[c * 4 + 2]
        w11 = w_dec_ref[c * 4 + 3]
        w_sel = jnp.where(y_odd,
                          jnp.where(x_odd, w11, w10),
                          jnp.where(x_odd, w01, w00))       # (1, HW), broadcast over TN
        out = out + p * w_sel

    # ---- Sigmoid ----
    o_ref[...] = jax.nn.sigmoid(out).astype(o_ref.dtype)


def _device_kind():
    try:
        return jax.devices()[0].device_kind.lower()
    except Exception:
        return ""


def _pick_tiling(n, hw):
    """Per-generation batch-block size (tn) and scoped-VMEM limit."""
    kind = _device_kind()
    if "v6" in kind:
        # 128 MiB VMEM, 2 vst slots: go big to amortize the ~0.35us/step overhead
        cap, vmem_bytes, want_two_blocks = 1024, 64 << 20, False
    elif "v5" in kind:
        # 128 MiB VMEM, single vst slot: bigger blocks, keep limit above 16 MiB default
        cap, vmem_bytes, want_two_blocks = 512, 32 << 20, False
    else:
        # v7x (2 TCs, 64 MiB VMEM/TC) and unknown chips: stay conservative and make
        # sure the "parallel" batch grid has >= 2 blocks so both TensorCores get work.
        cap, vmem_bytes, want_two_blocks = 256, 32 << 20, True

    # ~18 live fp32 (tn, hw) planes: 9 taps + temporaries + double-buffered in/out tiles
    budget = ((vmem_bytes // 2) // (18 * hw * 4) // 8) * 8
    tn = max(8, min(cap, budget))
    if want_two_blocks and n >= 16:
        tn = min(tn, max(8, (n // 2 // 8) * 8))
    if tn >= n:
        return n, vmem_bytes
    return max(8, (tn // 8) * 8), vmem_bytes


def simple_unet_forward(x, params, *, tn=None):
    """x: (N, 1, H, W) float32 NCHW, like the PyTorch module."""
    N, C, H, W = x.shape
    assert C == 1 and H % 2 == 0 and W % 2 == 0
    HW = H * W

    # free reshape: one flattened image per row, no wrapper-side pad / transpose
    xf = x.reshape(N, HW).astype(jnp.float32)

    if tn is None:
        tn, vmem_bytes = _pick_tiling(N, HW)
    else:
        vmem_bytes = 32 << 20
    n_pad = (-N) % tn
    if n_pad:
        xf = jnp.concatenate([xf, jnp.zeros((n_pad, HW), jnp.float32)], axis=0)
    Np = N + n_pad

    w_enc = params["w_enc"].reshape(NUM_HIDDEN * 9).astype(jnp.float32)   # (c, kh, kw) flat
    b_enc = params["b_enc"].astype(jnp.float32)                           # (4,)
    w_dec = params["w_dec"].reshape(NUM_HIDDEN * 4).astype(jnp.float32)   # (c, kh, kw) flat
    b_dec = params["b_dec"].astype(jnp.float32)                           # (1,)

    kernel = functools.partial(unet_kernel, H=H, W=W)

    out = pl.pallas_call(
        kernel,
        out_shape=jax.ShapeDtypeStruct((Np, HW), jnp.float32),
        grid=(Np // tn,),
        in_specs=[
            pl.BlockSpec((tn, HW), lambda n: (n, 0)),
            pl.BlockSpec(memory_space=pltpu.MemorySpace.SMEM),
            pl.BlockSpec(memory_space=pltpu.MemorySpace.SMEM),
            pl.BlockSpec(memory_space=pltpu.MemorySpace.SMEM),
            pl.BlockSpec(memory_space=pltpu.MemorySpace.SMEM),
        ],
        out_specs=pl.BlockSpec((tn, HW), lambda n: (n, 0)),
        compiler_params=pltpu.CompilerParams(
            dimension_semantics=("parallel",),
            vmem_limit_bytes=vmem_bytes,
        ),
    )(xf, w_enc, b_enc, w_dec, b_dec)

    return out[:N].reshape(N, 1, H, W)  # free reshape back to NCHW


def reference_forward(x, params):
    """Pure-JAX reference mirroring the PyTorch module semantics."""
    w_enc, b_enc = params["w_enc"], params["b_enc"]
    w_dec, b_dec = params["w_dec"], params["b_dec"]
    y = jax.lax.conv_general_dilated(
        x, w_enc, window_strides=(1, 1), padding=((1, 1), (1, 1)),
        dimension_numbers=("NCHW", "OIHW", "NCHW"))
    y = jax.nn.relu(y + b_enc[None, :, None, None])
    pooled = jax.lax.reduce_window(
        y, -jnp.inf, jax.lax.max, (1, 1, 2, 2), (1, 1, 2, 2), "VALID")
    N, _, Hp, Wp = pooled.shape
    out = jnp.zeros((N, 1, 2 * Hp, 2 * Wp), jnp.float32)
    for kh in range(2):
        for kw in range(2):
            contrib = jnp.einsum("nchw,c->nhw", pooled, w_dec[:, 0, kh, kw])
            out = out.at[:, 0, kh::2, kw::2].set(contrib)
    return jax.nn.sigmoid(out + b_dec[0])


def init_params(key):
    k1, k2, k3, k4 = jax.random.split(key, 4)
    k_enc = 1.0 / (1 * 3 * 3) ** 0.5
    k_dec = 1.0 / (4 * 2 * 2) ** 0.5
    return {
        "w_enc": jax.random.uniform(k1, (NUM_HIDDEN, 1, 3, 3), jnp.float32, -k_enc, k_enc),
        "b_enc": jax.random.uniform(k2, (NUM_HIDDEN,), jnp.float32, -k_enc, k_enc),
        "w_dec": jax.random.uniform(k3, (NUM_HIDDEN, 1, 2, 2), jnp.float32, -k_dec, k_dec),
        "b_dec": jax.random.uniform(k4, (1,), jnp.float32, -k_dec, k_dec),
    }


if __name__ == "__main__":
    key = jax.random.PRNGKey(0)
    kx, kp = jax.random.split(key)
    x = jax.random.normal(kx, (2, 1, 16, 16), jnp.float32)  # (N, C=1, H, W)
    params = init_params(kp)

    out = jax.block_until_ready(simple_unet_forward(x, params))
    ref = jax.block_until_ready(reference_forward(x, params))

    assert out.shape == (2, 1, 16, 16), out.shape
    assert jnp.allclose(out, ref, atol=1e-4, rtol=1e-4), float(jnp.max(jnp.abs(out - ref)))
    print("KERNEL_OK")
</pallas_src>

<mosaic_0001>
module attributes {stable_mosaic.version = 11 : i64} {
  func.func @unet_kernel(%arg0: i32, %arg1: memref<2x256xf32, #tpu.memory_space<vmem>>, %arg2: memref<36xf32, #tpu.memory_space<smem>>, %arg3: memref<4xf32, #tpu.memory_space<smem>>, %arg4: memref<16xf32, #tpu.memory_space<smem>>, %arg5: memref<1xf32, #tpu.memory_space<smem>>, %arg6: memref<2x256xf32, #tpu.memory_space<vmem>>) attributes {dimension_semantics = [#tpu.dimension_semantics<parallel>], iteration_bounds = array<i64: 1>, scalar_prefetch = 0 : i64, scratch_operands = 0 : i64, tpu.core_type = #tpu.core_type<tc>, window_params = [{transform_indices = @transform_0, window_bounds = array<i64: 2, 256>}, {transform_indices = @transform_1, window_bounds = array<i64: 36>}, {transform_indices = @transform_2, window_bounds = array<i64: 4>}, {transform_indices = @transform_3, window_bounds = array<i64: 16>}, {transform_indices = @transform_4, window_bounds = array<i64: 1>}, {transform_indices = @transform_5, window_bounds = array<i64: 2, 256>}]} {
    %c0 = arith.constant 0 : index
    %c0_0 = arith.constant 0 : index
    %0 = vector.load %arg1[%c0, %c0_0] : memref<2x256xf32, #tpu.memory_space<vmem>>, vector<2x256xf32>
    %1 = tpu.iota {dimensions = array<i32: 1>} : vector<1x256xi32>
    %c15_i32 = arith.constant 15 : i32
    %2 = vector.broadcast %c15_i32 : i32 to vector<1x256xi32>
    %3 = arith.andi %1, %2 : vector<1x256xi32>
    %c4_i32 = arith.constant 4 : i32
    %4 = vector.broadcast %c4_i32 : i32 to vector<1x256xi32>
    %5 = arith.shrsi %1, %4 : vector<1x256xi32>
    %c16_i32 = arith.constant 16 : i32
    %6 = vector.broadcast %c16_i32 : i32 to vector<1x256xi32>
    %7 = arith.andi %1, %6 : vector<1x256xi32>
    %c0_i32 = arith.constant 0 : i32
    %8 = vector.broadcast %c0_i32 : i32 to vector<1x256xi32>
    %9 = arith.cmpi ne, %7, %8 : vector<1x256xi32>
    %c1_i32 = arith.constant 1 : i32
    %10 = vector.broadcast %c1_i32 : i32 to vector<1x256xi32>
    %11 = arith.andi %1, %10 : vector<1x256xi32>
    %c0_i32_1 = arith.constant 0 : i32
    %12 = vector.broadcast %c0_i32_1 : i32 to vector<1x256xi32>
    %13 = arith.cmpi ne, %11, %12 : vector<1x256xi32>
    %c1_i32_2 = arith.constant 1 : i32
    %14 = vector.broadcast %c1_i32_2 : i32 to vector<1x256xi32>
    %15 = arith.cmpi sge, %5, %14 : vector<1x256xi32>
    %c14_i32 = arith.constant 14 : i32
    %16 = vector.broadcast %c14_i32 : i32 to vector<1x256xi32>
    %17 = arith.cmpi sle, %5, %16 : vector<1x256xi32>
    %c1_i32_3 = arith.constant 1 : i32
    %18 = vector.broadcast %c1_i32_3 : i32 to vector<1x256xi32>
    %19 = arith.cmpi sge, %3, %18 : vector<1x256xi32>
    %c14_i32_4 = arith.constant 14 : i32
    %20 = vector.broadcast %c14_i32_4 : i32 to vector<1x256xi32>
    %21 = arith.cmpi sle, %3, %20 : vector<1x256xi32>
    %22 = arith.andi %15, %19 : vector<1x256xi1>
    %23 = arith.andi %15, %21 : vector<1x256xi1>
    %24 = arith.andi %17, %19 : vector<1x256xi1>
    %25 = arith.andi %17, %21 : vector<1x256xi1>
    %c17_i32 = arith.constant 17 : i32
    %26 = tpu.dynamic_rotate %0 by %c17_i32 dim 1 : vector<2x256xf32>, i32 -> vector<2x256xf32>
    %cst = arith.constant 0.000000e+00 : f32
    %27 = vector.shape_cast %22 : vector<1x256xi1> to vector<1x256xi1>
    %28 = vector.broadcast %27 : vector<1x256xi1> to vector<2x256xi1>
    %29 = vector.broadcast %cst : f32 to vector<2x256xf32>
    %30 = arith.select %28, %26, %29 : vector<2x256xi1>, vector<2x256xf32>
    %c16_i32_5 = arith.constant 16 : i32
    %31 = tpu.dynamic_rotate %0 by %c16_i32_5 dim 1 : vector<2x256xf32>, i32 -> vector<2x256xf32>
    %cst_6 = arith.constant 0.000000e+00 : f32
    %32 = vector.shape_cast %15 : vector<1x256xi1> to vector<1x256xi1>
    %33 = vector.broadcast %32 : vector<1x256xi1> to vector<2x256xi1>
    %34 = vector.broadcast %cst_6 : f32 to vector<2x256xf32>
    %35 = arith.select %33, %31, %34 : vector<2x256xi1>, vector<2x256xf32>
    %c15_i32_7 = arith.constant 15 : i32
    %36 = tpu.dynamic_rotate %0 by %c15_i32_7 dim 1 : vector<2x256xf32>, i32 -> vector<2x256xf32>
    %cst_8 = arith.constant 0.000000e+00 : f32
    %37 = vector.shape_cast %23 : vector<1x256xi1> to vector<1x256xi1>
    %38 = vector.broadcast %37 : vector<1x256xi1> to vector<2x256xi1>
    %39 = vector.broadcast %cst_8 : f32 to vector<2x256xf32>
    %40 = arith.select %38, %36, %39 : vector<2x256xi1>, vector<2x256xf32>
    %c1_i32_9 = arith.constant 1 : i32
    %41 = tpu.dynamic_rotate %0 by %c1_i32_9 dim 1 : vector<2x256xf32>, i32 -> vector<2x256xf32>
    %cst_10 = arith.constant 0.000000e+00 : f32
    %42 = vector.shape_cast %19 : vector<1x256xi1> to vector<1x256xi1>
    %43 = vector.broadcast %42 : vector<1x256xi1> to vector<2x256xi1>
    %44 = vector.broadcast %cst_10 : f32 to vector<2x256xf32>
    %45 = arith.select %43, %41, %44 : vector<2x256xi1>, vector<2x256xf32>
    %c255_i32 = arith.constant 255 : i32
    %46 = tpu.dynamic_rotate %0 by %c255_i32 dim 1 : vector<2x256xf32>, i32 -> vector<2x256xf32>
    %cst_11 = arith.constant 0.000000e+00 : f32
    %47 = vector.shape_cast %21 : vector<1x256xi1> to vector<1x256xi1>
    %48 = vector.broadcast %47 : vector<1x256xi1> to vector<2x256xi1>
    %49 = vector.broadcast %cst_11 : f32 to vector<2x256xf32>
    %50 = arith.select %48, %46, %49 : vector<2x256xi1>, vector<2x256xf32>
    %c241_i32 = arith.constant 241 : i32
    %51 = tpu.dynamic_rotate %0 by %c241_i32 dim 1 : vector<2x256xf32>, i32 -> vector<2x256xf32>
    %cst_12 = arith.constant 0.000000e+00 : f32
    %52 = vector.shape_cast %24 : vector<1x256xi1> to vector<1x256xi1>
    %53 = vector.broadcast %52 : vector<1x256xi1> to vector<2x256xi1>
    %54 = vector.broadcast %cst_12 : f32 to vector<2x256xf32>
    %55 = arith.select %53, %51, %54 : vector<2x256xi1>, vector<2x256xf32>
    %c240_i32 = arith.constant 240 : i32
    %56 = tpu.dynamic_rotate %0 by %c240_i32 dim 1 : vector<2x256xf32>, i32 -> vector<2x256xf32>
    %cst_13 = arith.constant 0.000000e+00 : f32
    %57 = vector.shape_cast %17 : vector<1x256xi1> to vector<1x256xi1>
    %58 = vector.broadcast %57 : vector<1x256xi1> to vector<2x256xi1>
    %59 = vector.broadcast %cst_13 : f32 to vector<2x256xf32>
    %60 = arith.select %58, %56, %59 : vector<2x256xi1>, vector<2x256xf32>
    %c239_i32 = arith.constant 239 : i32
    %61 = tpu.dynamic_rotate %0 by %c239_i32 dim 1 : vector<2x256xf32>, i32 -> vector<2x256xf32>
    %cst_14 = arith.constant 0.000000e+00 : f32
    %62 = vector.shape_cast %25 : vector<1x256xi1> to vector<1x256xi1>
    %63 = vector.broadcast %62 : vector<1x256xi1> to vector<2x256xi1>
    %64 = vector.broadcast %cst_14 : f32 to vector<2x256xf32>
    %65 = arith.select %63, %61, %64 : vector<2x256xi1>, vector<2x256xf32>
    %c0_15 = arith.constant 0 : index
    %66 = memref.load %arg5[%c0_15] : memref<1xf32, #tpu.memory_space<smem>>
    %67 = vector.broadcast %66 : f32 to vector<2x256xf32>
    %c0_16 = arith.constant 0 : index
    %68 = memref.load %arg2[%c0_16] : memref<36xf32, #tpu.memory_space<smem>>
    %69 = vector.broadcast %68 : f32 to vector<2x256xf32>
    %70 = arith.mulf %30, %69 : vector<2x256xf32>
    %c1 = arith.constant 1 : index
    %71 = memref.load %arg2[%c1] : memref<36xf32, #tpu.memory_space<smem>>
    %72 = vector.broadcast %71 : f32 to vector<2x256xf32>
    %73 = arith.mulf %35, %72 : vector<2x256xf32>
    %74 = arith.addf %70, %73 : vector<2x256xf32>
    %c2 = arith.constant 2 : index
    %75 = memref.load %arg2[%c2] : memref<36xf32, #tpu.memory_space<smem>>
    %76 = vector.broadcast %75 : f32 to vector<2x256xf32>
    %77 = arith.mulf %40, %76 : vector<2x256xf32>
    %78 = arith.addf %74, %77 : vector<2x256xf32>
    %c3 = arith.constant 3 : index
    %79 = memref.load %arg2[%c3] : memref<36xf32, #tpu.memory_space<smem>>
    %80 = vector.broadcast %79 : f32 to vector<2x256xf32>
    %81 = arith.mulf %45, %80 : vector<2x256xf32>
    %82 = arith.addf %78, %81 : vector<2x256xf32>
    %c4 = arith.constant 4 : index
    %83 = memref.load %arg2[%c4] : memref<36xf32, #tpu.memory_space<smem>>
    %84 = vector.broadcast %83 : f32 to vector<2x256xf32>
    %85 = arith.mulf %0, %84 : vector<2x256xf32>
    %86 = arith.addf %82, %85 : vector<2x256xf32>
    %c5 = arith.constant 5 : index
    %87 = memref.load %arg2[%c5] : memref<36xf32, #tpu.memory_space<smem>>
    %88 = vector.broadcast %87 : f32 to vector<2x256xf32>
    %89 = arith.mulf %50, %88 : vector<2x256xf32>
    %90 = arith.addf %86, %89 : vector<2x256xf32>
    %c6 = arith.constant 6 : index
    %91 = memref.load %arg2[%c6] : memref<36xf32, #tpu.memory_space<smem>>
    %92 = vector.broadcast %91 : f32 to vector<2x256xf32>
    %93 = arith.mulf %55, %92 : vector<2x256xf32>
    %94 = arith.addf %90, %93 : vector<2x256xf32>
    %c7 = arith.constant 7 : index
    %95 = memref.load %arg2[%c7] : memref<36xf32, #tpu.memory_space<smem>>
    %96 = vector.broadcast %95 : f32 to vector<2x256xf32>
    %97 = arith.mulf %60, %96 : vector<2x256xf32>
    %98 = arith.addf %94, %97 : vector<2x256xf32>
    %c8 = arith.constant 8 : index
    %99 = memref.load %arg2[%c8] : memref<36xf32, #tpu.memory_space<smem>>
    %100 = vector.broadcast %99 : f32 to vector<2x256xf32>
    %101 = arith.mulf %65, %100 : vector<2x256xf32>
    %102 = arith.addf %98, %101 : vector<2x256xf32>
    %c0_17 = arith.constant 0 : index
    %103 = memref.load %arg3[%c0_17] : memref<4xf32, #tpu.memory_space<smem>>
    %104 = vector.broadcast %103 : f32 to vector<2x256xf32>
    %105 = arith.addf %102, %104 : vector<2x256xf32>
    %cst_18 = arith.constant 0.000000e+00 : f32
    %106 = vector.broadcast %cst_18 : f32 to vector<2x256xf32>
    %107 = arith.maximumf %105, %106 : vector<2x256xf32>
    %c240_i32_19 = arith.constant 240 : i32
    %108 = tpu.dynamic_rotate %107 by %c240_i32_19 dim 1 : vector<2x256xf32>, i32 -> vector<2x256xf32>
    %c16_i32_20 = arith.constant 16 : i32
    %109 = tpu.dynamic_rotate %107 by %c16_i32_20 dim 1 : vector<2x256xf32>, i32 -> vector<2x256xf32>
    %110 = vector.shape_cast %9 : vector<1x256xi1> to vector<1x256xi1>
    %111 = vector.broadcast %110 : vector<1x256xi1> to vector<2x256xi1>
    %112 = arith.select %111, %109, %108 : vector<2x256xi1>, vector<2x256xf32>
    %113 = arith.maximumf %107, %112 : vector<2x256xf32>
    %c255_i32_21 = arith.constant 255 : i32
    %114 = tpu.dynamic_rotate %113 by %c255_i32_21 dim 1 : vector<2x256xf32>, i32 -> vector<2x256xf32>
    %c1_i32_22 = arith.constant 1 : i32
    %115 = tpu.dynamic_rotate %113 by %c1_i32_22 dim 1 : vector<2x256xf32>, i32 -> vector<2x256xf32>
    %116 = vector.shape_cast %13 : vector<1x256xi1> to vector<1x256xi1>
    %117 = vector.broadcast %116 : vector<1x256xi1> to vector<2x256xi1>
    %118 = arith.select %117, %115, %114 : vector<2x256xi1>, vector<2x256xf32>
    %119 = arith.maximumf %113, %118 : vector<2x256xf32>
    %c0_23 = arith.constant 0 : index
    %120 = memref.load %arg4[%c0_23] : memref<16xf32, #tpu.memory_space<smem>>
    %c1_24 = arith.constant 1 : index
    %121 = memref.load %arg4[%c1_24] : memref<16xf32, #tpu.memory_space<smem>>
    %c2_25 = arith.constant 2 : index
    %122 = memref.load %arg4[%c2_25] : memref<16xf32, #tpu.memory_space<smem>>
    %c3_26 = arith.constant 3 : index
    %123 = memref.load %arg4[%c3_26] : memref<16xf32, #tpu.memory_space<smem>>
    %124 = vector.broadcast %123 : f32 to vector<1x256xf32>
    %125 = vector.broadcast %122 : f32 to vector<1x256xf32>
    %126 = arith.select %13, %124, %125 : vector<1x256xi1>, vector<1x256xf32>
    %127 = vector.broadcast %121 : f32 to vector<1x256xf32>
    %128 = vector.broadcast %120 : f32 to vector<1x256xf32>
    %129 = arith.select %13, %127, %128 : vector<1x256xi1>, vector<1x256xf32>
    %130 = arith.select %9, %126, %129 : vector<1x256xi1>, vector<1x256xf32>
    %131 = vector.broadcast %130 : vector<1x256xf32> to vector<2x256xf32>
    %132 = arith.mulf %119, %131 : vector<2x256xf32>
    %133 = arith.addf %67, %132 : vector<2x256xf32>
    %c9 = arith.constant 9 : index
    %134 = memref.load %arg2[%c9] : memref<36xf32, #tpu.memory_space<smem>>
    %135 = vector.broadcast %134 : f32 to vector<2x256xf32>
    %136 = arith.mulf %30, %135 : vector<2x256xf32>
    %c10 = arith.constant 10 : index
    %137 = memref.load %arg2[%c10] : memref<36xf32, #tpu.memory_space<smem>>
    %138 = vector.broadcast %137 : f32 to vector<2x256xf32>
    %139 = arith.mulf %35, %138 : vector<2x256xf32>
    %140 = arith.addf %136, %139 : vector<2x256xf32>
    %c11 = arith.constant 11 : index
    %141 = memref.load %arg2[%c11] : memref<36xf32, #tpu.memory_space<smem>>
    %142 = vector.broadcast %141 : f32 to vector<2x256xf32>
    %143 = arith.mulf %40, %142 : vector<2x256xf32>
    %144 = arith.addf %140, %143 : vector<2x256xf32>
    %c12 = arith.constant 12 : index
    %145 = memref.load %arg2[%c12] : memref<36xf32, #tpu.memory_space<smem>>
    %146 = vector.broadcast %145 : f32 to vector<2x256xf32>
    %147 = arith.mulf %45, %146 : vector<2x256xf32>
    %148 = arith.addf %144, %147 : vector<2x256xf32>
    %c13 = arith.constant 13 : index
    %149 = memref.load %arg2[%c13] : memref<36xf32, #tpu.memory_space<smem>>
    %150 = vector.broadcast %149 : f32 to vector<2x256xf32>
    %151 = arith.mulf %0, %150 : vector<2x256xf32>
    %152 = arith.addf %148, %151 : vector<2x256xf32>
    %c14 = arith.constant 14 : index
    %153 = memref.load %arg2[%c14] : memref<36xf32, #tpu.memory_space<smem>>
    %154 = vector.broadcast %153 : f32 to vector<2x256xf32>
    %155 = arith.mulf %50, %154 : vector<2x256xf32>
    %156 = arith.addf %152, %155 : vector<2x256xf32>
    %c15 = arith.constant 15 : index
    %157 = memref.load %arg2[%c15] : memref<36xf32, #tpu.memory_space<smem>>
    %158 = vector.broadcast %157 : f32 to vector<2x256xf32>
    %159 = arith.mulf %55, %158 : vector<2x256xf32>
    %160 = arith.addf %156, %159 : vector<2x256xf32>
    %c16 = arith.constant 16 : index
    %161 = memref.load %arg2[%c16] : memref<36xf32, #tpu.memory_space<smem>>
    %162 = vector.broadcast %161 : f32 to vector<2x256xf32>
    %163 = arith.mulf %60, %162 : vector<2x256xf32>
    %164 = arith.addf %160, %163 : vector<2x256xf32>
    %c17 = arith.constant 17 : index
    %165 = memref.load %arg2[%c17] : memref<36xf32, #tpu.memory_space<smem>>
    %166 = vector.broadcast %165 : f32 to vector<2x256xf32>
    %167 = arith.mulf %65, %166 : vector<2x256xf32>
    %168 = arith.addf %164, %167 : vector<2x256xf32>
    %c1_27 = arith.constant 1 : index
    %169 = memref.load %arg3[%c1_27] : memref<4xf32, #tpu.memory_space<smem>>
    %170 = vector.broadcast %169 : f32 to vector<2x256xf32>
    %171 = arith.addf %168, %170 : vector<2x256xf32>
    %cst_28 = arith.constant 0.000000e+00 : f32
    %172 = vector.broadcast %cst_28 : f32 to vector<2x256xf32>
    %173 = arith.maximumf %171, %172 : vector<2x256xf32>
    %c240_i32_29 = arith.constant 240 : i32
    %174 = tpu.dynamic_rotate %173 by %c240_i32_29 dim 1 : vector<2x256xf32>, i32 -> vector<2x256xf32>
    %c16_i32_30 = arith.constant 16 : i32
    %175 = tpu.dynamic_rotate %173 by %c16_i32_30 dim 1 : vector<2x256xf32>, i32 -> vector<2x256xf32>
    %176 = vector.shape_cast %9 : vector<1x256xi1> to vector<1x256xi1>
    %177 = vector.broadcast %176 : vector<1x256xi1> to vector<2x256xi1>
    %178 = arith.select %177, %175, %174 : vector<2x256xi1>, vector<2x256xf32>
    %179 = arith.maximumf %173, %178 : vector<2x256xf32>
    %c255_i32_31 = arith.constant 255 : i32
    %180 = tpu.dynamic_rotate %179 by %c255_i32_31 dim 1 : vector<2x256xf32>, i32 -> vector<2x256xf32>
    %c1_i32_32 = arith.constant 1 : i32
    %181 = tpu.dynamic_rotate %179 by %c1_i32_32 dim 1 : vector<2x256xf32>, i32 -> vector<2x256xf32>
    %182 = vector.shape_cast %13 : vector<1x256xi1> to vector<1x256xi1>
    %183 = vector.broadcast %182 : vector<1x256xi1> to vector<2x256xi1>
    %184 = arith.select %183, %181, %180 : vector<2x256xi1>, vector<2x256xf32>
    %185 = arith.maximumf %179, %184 : vector<2x256xf32>
    %c4_33 = arith.constant 4 : index
    %186 = memref.load %arg4[%c4_33] : memref<16xf32, #tpu.memory_space<smem>>
    %c5_34 = arith.constant 5 : index
    %187 = memref.load %arg4[%c5_34] : memref<16xf32, #tpu.memory_space<smem>>
    %c6_35 = arith.constant 6 : index
    %188 = memref.load %arg4[%c6_35] : memref<16xf32, #tpu.memory_space<smem>>
    %c7_36 = arith.constant 7 : index
    %189 = memref.load %arg4[%c7_36] : memref<16xf32, #tpu.memory_space<smem>>
    %190 = vector.broadcast %189 : f32 to vector<1x256xf32>
    %191 = vector.broadcast %188 : f32 to vector<1x256xf32>
    %192 = arith.select %13, %190, %191 : vector<1x256xi1>, vector<1x256xf32>
    %193 = vector.broadcast %187 : f32 to vector<1x256xf32>
    %194 = vector.broadcast %186 : f32 to vector<1x256xf32>
    %195 = arith.select %13, %193, %194 : vector<1x256xi1>, vector<1x256xf32>
    %196 = arith.select %9, %192, %195 : vector<1x256xi1>, vector<1x256xf32>
    %197 = vector.broadcast %196 : vector<1x256xf32> to vector<2x256xf32>
    %198 = arith.mulf %185, %197 : vector<2x256xf32>
    %199 = arith.addf %133, %198 : vector<2x256xf32>
    %c18 = arith.constant 18 : index
    %200 = memref.load %arg2[%c18] : memref<36xf32, #tpu.memory_space<smem>>
    %201 = vector.broadcast %200 : f32 to vector<2x256xf32>
    %202 = arith.mulf %30, %201 : vector<2x256xf32>
    %c19 = arith.constant 19 : index
    %203 = memref.load %arg2[%c19] : memref<36xf32, #tpu.memory_space<smem>>
    %204 = vector.broadcast %203 : f32 to vector<2x256xf32>
    %205 = arith.mulf %35, %204 : vector<2x256xf32>
    %206 = arith.addf %202, %205 : vector<2x256xf32>
    %c20 = arith.constant 20 : index
    %207 = memref.load %arg2[%c20] : memref<36xf32, #tpu.memory_space<smem>>
    %208 = vector.broadcast %207 : f32 to vector<2x256xf32>
    %209 = arith.mulf %40, %208 : vector<2x256xf32>
    %210 = arith.addf %206, %209 : vector<2x256xf32>
    %c21 = arith.constant 21 : index
    %211 = memref.load %arg2[%c21] : memref<36xf32, #tpu.memory_space<smem>>
    %212 = vector.broadcast %211 : f32 to vector<2x256xf32>
    %213 = arith.mulf %45, %212 : vector<2x256xf32>
    %214 = arith.addf %210, %213 : vector<2x256xf32>
    %c22 = arith.constant 22 : index
    %215 = memref.load %arg2[%c22] : memref<36xf32, #tpu.memory_space<smem>>
    %216 = vector.broadcast %215 : f32 to vector<2x256xf32>
    %217 = arith.mulf %0, %216 : vector<2x256xf32>
    %218 = arith.addf %214, %217 : vector<2x256xf32>
    %c23 = arith.constant 23 : index
    %219 = memref.load %arg2[%c23] : memref<36xf32, #tpu.memory_space<smem>>
    %220 = vector.broadcast %219 : f32 to vector<2x256xf32>
    %221 = arith.mulf %50, %220 : vector<2x256xf32>
    %222 = arith.addf %218, %221 : vector<2x256xf32>
    %c24 = arith.constant 24 : index
    %223 = memref.load %arg2[%c24] : memref<36xf32, #tpu.memory_space<smem>>
    %224 = vector.broadcast %223 : f32 to vector<2x256xf32>
    %225 = arith.mulf %55, %224 : vector<2x256xf32>
    %226 = arith.addf %222, %225 : vector<2x256xf32>
    %c25 = arith.constant 25 : index
    %227 = memref.load %arg2[%c25] : memref<36xf32, #tpu.memory_space<smem>>
    %228 = vector.broadcast %227 : f32 to vector<2x256xf32>
    %229 = arith.mulf %60, %228 : vector<2x256xf32>
    %230 = arith.addf %226, %229 : vector<2x256xf32>
    %c26 = arith.constant 26 : index
    %231 = memref.load %arg2[%c26] : memref<36xf32, #tpu.memory_space<smem>>
    %232 = vector.broadcast %231 : f32 to vector<2x256xf32>
    %233 = arith.mulf %65, %232 : vector<2x256xf32>
    %234 = arith.addf %230, %233 : vector<2x256xf32>
    %c2_37 = arith.constant 2 : index
    %235 = memref.load %arg3[%c2_37] : memref<4xf32, #tpu.memory_space<smem>>
    %236 = vector.broadcast %235 : f32 to vector<2x256xf32>
    %237 = arith.addf %234, %236 : vector<2x256xf32>
    %cst_38 = arith.constant 0.000000e+00 : f32
    %238 = vector.broadcast %cst_38 : f32 to vector<2x256xf32>
    %239 = arith.maximumf %237, %238 : vector<2x256xf32>
    %c240_i32_39 = arith.constant 240 : i32
    %240 = tpu.dynamic_rotate %239 by %c240_i32_39 dim 1 : vector<2x256xf32>, i32 -> vector<2x256xf32>
    %c16_i32_40 = arith.constant 16 : i32
    %241 = tpu.dynamic_rotate %239 by %c16_i32_40 dim 1 : vector<2x256xf32>, i32 -> vector<2x256xf32>
    %242 = vector.shape_cast %9 : vector<1x256xi1> to vector<1x256xi1>
    %243 = vector.broadcast %242 : vector<1x256xi1> to vector<2x256xi1>
    %244 = arith.select %243, %241, %240 : vector<2x256xi1>, vector<2x256xf32>
    %245 = arith.maximumf %239, %244 : vector<2x256xf32>
    %c255_i32_41 = arith.constant 255 : i32
    %246 = tpu.dynamic_rotate %245 by %c255_i32_41 dim 1 : vector<2x256xf32>, i32 -> vector<2x256xf32>
    %c1_i32_42 = arith.constant 1 : i32
    %247 = tpu.dynamic_rotate %245 by %c1_i32_42 dim 1 : vector<2x256xf32>, i32 -> vector<2x256xf32>
    %248 = vector.shape_cast %13 : vector<1x256xi1> to vector<1x256xi1>
    %249 = vector.broadcast %248 : vector<1x256xi1> to vector<2x256xi1>
    %250 = arith.select %249, %247, %246 : vector<2x256xi1>, vector<2x256xf32>
    %251 = arith.maximumf %245, %250 : vector<2x256xf32>
    %c8_43 = arith.constant 8 : index
    %252 = memref.load %arg4[%c8_43] : memref<16xf32, #tpu.memory_space<smem>>
    %c9_44 = arith.constant 9 : index
    %253 = memref.load %arg4[%c9_44] : memref<16xf32, #tpu.memory_space<smem>>
    %c10_45 = arith.constant 10 : index
    %254 = memref.load %arg4[%c10_45] : memref<16xf32, #tpu.memory_space<smem>>
    %c11_46 = arith.constant 11 : index
    %255 = memref.load %arg4[%c11_46] : memref<16xf32, #tpu.memory_space<smem>>
    %256 = vector.broadcast %255 : f32 to vector<1x256xf32>
    %257 = vector.broadcast %254 : f32 to vector<1x256xf32>
    %258 = arith.select %13, %256, %257 : vector<1x256xi1>, vector<1x256xf32>
    %259 = vector.broadcast %253 : f32 to vector<1x256xf32>
    %260 = vector.broadcast %252 : f32 to vector<1x256xf32>
    %261 = arith.select %13, %259, %260 : vector<1x256xi1>, vector<1x256xf32>
    %262 = arith.select %9, %258, %261 : vector<1x256xi1>, vector<1x256xf32>
    %263 = vector.broadcast %262 : vector<1x256xf32> to vector<2x256xf32>
    %264 = arith.mulf %251, %263 : vector<2x256xf32>
    %265 = arith.addf %199, %264 : vector<2x256xf32>
    %c27 = arith.constant 27 : index
    %266 = memref.load %arg2[%c27] : memref<36xf32, #tpu.memory_space<smem>>
    %267 = vector.broadcast %266 : f32 to vector<2x256xf32>
    %268 = arith.mulf %30, %267 : vector<2x256xf32>
    %c28 = arith.constant 28 : index
    %269 = memref.load %arg2[%c28] : memref<36xf32, #tpu.memory_space<smem>>
    %270 = vector.broadcast %269 : f32 to vector<2x256xf32>
    %271 = arith.mulf %35, %270 : vector<2x256xf32>
    %272 = arith.addf %268, %271 : vector<2x256xf32>
    %c29 = arith.constant 29 : index
    %273 = memref.load %arg2[%c29] : memref<36xf32, #tpu.memory_space<smem>>
    %274 = vector.broadcast %273 : f32 to vector<2x256xf32>
    %275 = arith.mulf %40, %274 : vector<2x256xf32>
    %276 = arith.addf %272, %275 : vector<2x256xf32>
    %c30 = arith.constant 30 : index
    %277 = memref.load %arg2[%c30] : memref<36xf32, #tpu.memory_space<smem>>
    %278 = vector.broadcast %277 : f32 to vector<2x256xf32>
    %279 = arith.mulf %45, %278 : vector<2x256xf32>
    %280 = arith.addf %276, %279 : vector<2x256xf32>
    %c31 = arith.constant 31 : index
    %281 = memref.load %arg2[%c31] : memref<36xf32, #tpu.memory_space<smem>>
    %282 = vector.broadcast %281 : f32 to vector<2x256xf32>
    %283 = arith.mulf %0, %282 : vector<2x256xf32>
    %284 = arith.addf %280, %283 : vector<2x256xf32>
    %c32 = arith.constant 32 : index
    %285 = memref.load %arg2[%c32] : memref<36xf32, #tpu.memory_space<smem>>
    %286 = vector.broadcast %285 : f32 to vector<2x256xf32>
    %287 = arith.mulf %50, %286 : vector<2x256xf32>
    %288 = arith.addf %284, %287 : vector<2x256xf32>
    %c33 = arith.constant 33 : index
    %289 = memref.load %arg2[%c33] : memref<36xf32, #tpu.memory_space<smem>>
    %290 = vector.broadcast %289 : f32 to vector<2x256xf32>
    %291 = arith.mulf %55, %290 : vector<2x256xf32>
    %292 = arith.addf %288, %291 : vector<2x256xf32>
    %c34 = arith.constant 34 : index
    %293 = memref.load %arg2[%c34] : memref<36xf32, #tpu.memory_space<smem>>
    %294 = vector.broadcast %293 : f32 to vector<2x256xf32>
    %295 = arith.mulf %60, %294 : vector<2x256xf32>
    %296 = arith.addf %292, %295 : vector<2x256xf32>
    %c35 = arith.constant 35 : index
    %297 = memref.load %arg2[%c35] : memref<36xf32, #tpu.memory_space<smem>>
    %298 = vector.broadcast %297 : f32 to vector<2x256xf32>
    %299 = arith.mulf %65, %298 : vector<2x256xf32>
    %300 = arith.addf %296, %299 : vector<2x256xf32>
    %c3_47 = arith.constant 3 : index
    %301 = memref.load %arg3[%c3_47] : memref<4xf32, #tpu.memory_space<smem>>
    %302 = vector.broadcast %301 : f32 to vector<2x256xf32>
    %303 = arith.addf %300, %302 : vector<2x256xf32>
    %cst_48 = arith.constant 0.000000e+00 : f32
    %304 = vector.broadcast %cst_48 : f32 to vector<2x256xf32>
    %305 = arith.maximumf %303, %304 : vector<2x256xf32>
    %c240_i32_49 = arith.constant 240 : i32
    %306 = tpu.dynamic_rotate %305 by %c240_i32_49 dim 1 : vector<2x256xf32>, i32 -> vector<2x256xf32>
    %c16_i32_50 = arith.constant 16 : i32
    %307 = tpu.dynamic_rotate %305 by %c16_i32_50 dim 1 : vector<2x256xf32>, i32 -> vector<2x256xf32>
    %308 = vector.shape_cast %9 : vector<1x256xi1> to vector<1x256xi1>
    %309 = vector.broadcast %308 : vector<1x256xi1> to vector<2x256xi1>
    %310 = arith.select %309, %307, %306 : vector<2x256xi1>, vector<2x256xf32>
    %311 = arith.maximumf %305, %310 : vector<2x256xf32>
    %c255_i32_51 = arith.constant 255 : i32
    %312 = tpu.dynamic_rotate %311 by %c255_i32_51 dim 1 : vector<2x256xf32>, i32 -> vector<2x256xf32>
    %c1_i32_52 = arith.constant 1 : i32
    %313 = tpu.dynamic_rotate %311 by %c1_i32_52 dim 1 : vector<2x256xf32>, i32 -> vector<2x256xf32>
    %314 = vector.shape_cast %13 : vector<1x256xi1> to vector<1x256xi1>
    %315 = vector.broadcast %314 : vector<1x256xi1> to vector<2x256xi1>
    %316 = arith.select %315, %313, %312 : vector<2x256xi1>, vector<2x256xf32>
    %317 = arith.maximumf %311, %316 : vector<2x256xf32>
    %c12_53 = arith.constant 12 : index
    %318 = memref.load %arg4[%c12_53] : memref<16xf32, #tpu.memory_space<smem>>
    %c13_54 = arith.constant 13 : index
    %319 = memref.load %arg4[%c13_54] : memref<16xf32, #tpu.memory_space<smem>>
    %c14_55 = arith.constant 14 : index
    %320 = memref.load %arg4[%c14_55] : memref<16xf32, #tpu.memory_space<smem>>
    %c15_56 = arith.constant 15 : index
    %321 = memref.load %arg4[%c15_56] : memref<16xf32, #tpu.memory_space<smem>>
    %322 = vector.broadcast %321 : f32 to vector<1x256xf32>
    %323 = vector.broadcast %320 : f32 to vector<1x256xf32>
    %324 = arith.select %13, %322, %323 : vector<1x256xi1>, vector<1x256xf32>
    %325 = vector.broadcast %319 : f32 to vector<1x256xf32>
    %326 = vector.broadcast %318 : f32 to vector<1x256xf32>
    %327 = arith.select %13, %325, %326 : vector<1x256xi1>, vector<1x256xf32>
    %328 = arith.select %9, %324, %327 : vector<1x256xi1>, vector<1x256xf32>
    %329 = vector.broadcast %328 : vector<1x256xf32> to vector<2x256xf32>
    %330 = arith.mulf %317, %329 : vector<2x256xf32>
    %331 = arith.addf %265, %330 : vector<2x256xf32>
    %332 = arith.negf %331 : vector<2x256xf32>
    %333 = math.exp %332 : vector<2x256xf32>
    %cst_57 = arith.constant 1.000000e+00 : f32
    %334 = vector.broadcast %cst_57 : f32 to vector<2x256xf32>
    %335 = arith.addf %334, %333 : vector<2x256xf32>
    %336 = arith.divf %334, %335 : vector<2x256xf32>
    %c0_58 = arith.constant 0 : index
    %c0_59 = arith.constant 0 : index
    %337 = vector.load %arg6[%c0_58, %c0_59] : memref<2x256xf32, #tpu.memory_space<vmem>>, vector<2x256xf32>
    tpu.vector_store %arg6[%c0_58, %c0_59], %336 {strides = array<i32>} : memref<2x256xf32, #tpu.memory_space<vmem>>, vector<2x256xf32>,
    return
  }
  func.func @transform_0(%arg0: i32) -> (i32, i32) {
    %c0_i32 = arith.constant 0 : i32
    %c0_i32_0 = arith.constant 0 : i32
    return %arg0, %c0_i32 : i32, i32
  }
  func.func @transform_1(%arg0: i32) -> i32 {
    %c0_i32 = arith.constant 0 : i32
    %c0_i32_0 = arith.constant 0 : i32
    return %c0_i32 : i32
  }
  func.func @transform_2(%arg0: i32) -> i32 {
    %c0_i32 = arith.constant 0 : i32
    %c0_i32_0 = arith.constant 0 : i32
    return %c0_i32 : i32
  }
  func.func @transform_3(%arg0: i32) -> i32 {
    %c0_i32 = arith.constant 0 : i32
    %c0_i32_0 = arith.constant 0 : i32
    return %c0_i32 : i32
  }
  func.func @transform_4(%arg0: i32) -> i32 {
    %c0_i32 = arith.constant 0 : i32
    %c0_i32_0 = arith.constant 0 : i32
    return %c0_i32 : i32
  }
  func.func @transform_5(%arg0: i32) -> (i32, i32) {
    %c0_i32 = arith.constant 0 : i32
    %c0_i32_0 = arith.constant 0 : i32
    return %arg0, %c0_i32 : i32, i32
  }
}

</mosaic_0001>

<llo_original>
// kernel: tpu_custom_call.1
$region0: #{tpu_custom_call.1}
  #allocation0 [shape = 'u32[]', space=smem, size = 0x4, offset = 0x4, fixed_abs, tag = 'smem constant byte address 0x4 - core index']
  #allocation1 [shape = 'u32[144,128]{1,0:T(1,128)}', space=vmem, size = 0x12000, scoped, tag = 'internal scratch']
  #allocation2 [shape = 'f32[1]{0:T(128)S(6)}', space=smem, size = 0x200, scoped, tag = 'scoped memory for tpu_custom_call.1']
  %s0 = inlined_call_operand.hbm [shape: f32[2,256], index: 0, kind: input, shape index: {}]
  %s1 = inlined_call_operand.vmem [shape: f32[36], index: 1, kind: input, shape index: {}]
  %s2 = inlined_call_operand.vmem [shape: f32[4], index: 2, kind: input, shape index: {}]
  %s3 = inlined_call_operand.vmem [shape: f32[16], index: 3, kind: input, shape index: {}]
  %s4 = inlined_call_operand.<no memory space> [shape: f32[1], index: 4, kind: input, shape index: {}]
  %s5 = inlined_call_operand.hbm [shape: f32[2,256], index: 5, kind: output, shape index: {}]
  %s6 = sld [smem:[#allocation0]]
  $region46: #{tpu_custom_call.1} parent=0
    _
  %s8 = ssub.s32 1, %s6
  %s9 = scalar_select 0, %s8, %s6
  %10 = sst [smem:[#allocation2]] %s4
  $region1: #{tpu_custom_call.1} parent=0
    #allocation3 [shape = 'u8[2048]{0}', space=vmem, size = 0x800, scoped, tag = 'input window, operand 0, single buffered']
    #allocation4 [shape = 's32[1]{0}', space=sflag, size = 0x4, scoped, tag = 'scoped memory for tpu_custom_call.1']
    #allocation5 [shape = 's32[1]{0}', space=sflag, size = 0x4, scoped, tag = 'scoped memory for tpu_custom_call.1']
    #allocation6 [shape = 's32[1]{0}', space=sflag, size = 0x4, scoped, tag = 'scoped memory for tpu_custom_call.1']
    #allocation7 [shape = 'u8[512]{0}', space=smem, size = 0x200, scoped, tag = 'input window, operand 1, single buffered']
    #allocation8 [shape = 'u8[512]{0}', space=smem, size = 0x200, scoped, tag = 'input window, operand 2, single buffered']
    #allocation9 [shape = 's32[1]{0}', space=sflag, size = 0x4, scoped, tag = 'scoped memory for tpu_custom_call.1']
    #allocation10 [shape = 'u8[512]{0}', space=smem, size = 0x200, scoped, tag = 'input window, operand 3, single buffered']
    #allocation11 [shape = 'u8[2048]{0}', space=vmem, size = 0x800, scoped, tag = 'output window, operand 0, single buffered']
    %11 = vsyncpa [#allocation4], 0
    %12 = vsyncpa [#allocation6], 0
    %13 = vsyncpa [#allocation9], 0
    %14 = vsyncpa [#allocation5], 0
    // Predicated region
    $region2: #{tpu_custom_call.1} parent=1 // pred_check
      _
    $region3: #{tpu_custom_call.1} parent=1 // pred_check_branch
      %16 = sbr.rel (0) target = $region5
    $region4: #{tpu_custom_call.1} parent=1 // pred_region
      %s18 = ssub.s32 64, 64
      %19 = vsyncadd [#allocation4], %s18
      %s21 = sshll.u32 [#allocation3], 4
      %s22 = int_to_ptr.vmem [resolvable:$true] %s21
      %24 = dma.hbm_to_vmem [thread:$0]  %s0, 64, %s22, [#allocation4]
    $region5: #{tpu_custom_call.1} parent=1 // pred_fallthru
      _
    // Predicated region
    $region6: #{tpu_custom_call.1} parent=1 // pred_check
      _
    $region7: #{tpu_custom_call.1} parent=1 // pred_check_branch
      %26 = sbr.rel (0) target = $region9
    $region8: #{tpu_custom_call.1} parent=1 // pred_region
      %s28 = ssub.s32 16, 16
      %29 = vsyncadd [#allocation6], %s28
      %s31 = sshll.u32 %s1, 4
      %s32 = int_to_ptr.vmem [resolvable:$true] %s31
      %34 = dma.vmem_to_smem %s32, 16, [#allocation7], [#allocation6]
    $region9: #{tpu_custom_call.1} parent=1 // pred_fallthru
      _
    // Predicated region
    $region10: #{tpu_custom_call.1} parent=1 // pred_check
      _
    $region11: #{tpu_custom_call.1} parent=1 // pred_check_branch
      %36 = sbr.rel (0) target = $region13
    $region12: #{tpu_custom_call.1} parent=1 // pred_region
      %s38 = ssub.s32 16, 16
      %39 = vsyncadd [#allocation9], %s38
      %s41 = sshll.u32 %s2, 4
      %s42 = int_to_ptr.vmem [resolvable:$true] %s41
      %44 = dma.vmem_to_smem %s42, 16, [#allocation8], [#allocation9]
    $region13: #{tpu_custom_call.1} parent=1 // pred_fallthru
      _
    // Predicated region
    $region14: #{tpu_custom_call.1} parent=1 // pred_check
      _
    $region15: #{tpu_custom_call.1} parent=1 // pred_check_branch
      %46 = sbr.rel (0) target = $region17
    $region16: #{tpu_custom_call.1} parent=1 // pred_region
      %s48 = ssub.s32 16, 16
      %49 = vsyncadd [#allocation9], %s48
      %s51 = sshll.u32 %s3, 4
      %s52 = int_to_ptr.vmem [resolvable:$true] %s51
      %54 = dma.vmem_to_smem %s52, 16, [#allocation10], [#allocation9]
    $region17: #{tpu_custom_call.1} parent=1 // pred_fallthru
      _
    // Predicated region
    $region18: #{tpu_custom_call.1} parent=1 // pred_check
      _
    $region19: #{tpu_custom_call.1} parent=1 // pred_check_branch
      %56 = sbr.rel (0) target = $region21
    $region20: #{tpu_custom_call.1} parent=1 // pred_region
      _
    $region21: #{tpu_custom_call.1} parent=1 // pred_fallthru
      _
    // Predicated region
    $region22: #{tpu_custom_call.1} parent=1 // pred_check
      _
    $region23: #{tpu_custom_call.1} parent=1 // pred_check_branch
      %58 = sbr.rel (0) target = $region25
    $region24: #{tpu_custom_call.1} parent=1 // pred_region
      %59 = dma.done [#allocation4], 64
    $region25: #{tpu_custom_call.1} parent=1 // pred_fallthru
      _
    // Predicated region
    $region26: #{tpu_custom_call.1} parent=1 // pred_check
      _
    $region27: #{tpu_custom_call.1} parent=1 // pred_check_branch
      %61 = sbr.rel (0) target = $region29
    $region28: #{tpu_custom_call.1} parent=1 // pred_region
      %62 = dma.done [#allocation6], 16
    $region29: #{tpu_custom_call.1} parent=1 // pred_fallthru
      _
    // Predicated region
    $region30: #{tpu_custom_call.1} parent=1 // pred_check
      _
    $region31: #{tpu_custom_call.1} parent=1 // pred_check_branch
      %64 = sbr.rel (0) target = $region33
    $region32: #{tpu_custom_call.1} parent=1 // pred_region
      %65 = dma.done [#allocation9], 16
    $region33: #{tpu_custom_call.1} parent=1 // pred_fallthru
      _
    // Predicated region
    $region34: #{tpu_custom_call.1} parent=1 // pred_check
      _
    $region35: #{tpu_custom_call.1} parent=1 // pred_check_branch
      %67 = sbr.rel (0) target = $region37
    $region36: #{tpu_custom_call.1} parent=1 // pred_region
      %68 = dma.done [#allocation9], 16
    $region37: #{tpu_custom_call.1} parent=1 // pred_fallthru
      _
    %69 = sfence
    %v70 = vld [vmem:[#allocation3] sm:$0xf]
    %v71 = vlaneseq
    %v72 = vand.u32 %v71, 127
    %v73 = vadd.s32 %v72, 128
    %v74 = vand.u32 %v72, 15
    %v75 = vand.u32 %v73, 15
    %v76 = vshra.s32 %v72, 4
    %v77 = vshra.s32 %v73, 4
    %v78 = vand.u32 %v72, 16
    %v79 = vand.u32 %v73, 16
    %vm80 = vcmp.ne.s32.totalorder %v78, 0
    %vm81 = vcmp.ne.s32.totalorder %v79, 0
    %v82 = vand.u32 %v72, 1
    %v83 = vand.u32 %v73, 1
    %vm84 = vcmp.ne.s32.totalorder %v82, 0
    %vm85 = vcmp.ne.s32.totalorder %v83, 0
    %vm86 = vcmp.ge.s32.totalorder %v76, 1
    %vm87 = vcmp.ge.s32.totalorder %v77, 1
    %vm88 = vcmp.le.s32.totalorder %v76, 14
    %vm89 = vcmp.le.s32.totalorder %v77, 14
    %vm90 = vcmp.ge.s32.totalorder %v74, 1
    %vm91 = vcmp.ge.s32.totalorder %v75, 1
    %vm92 = vcmp.le.s32.totalorder %v74, 14
    %vm93 = vcmp.le.s32.totalorder %v75, 14
    %vm94 = vmand %vm86, %vm90
    %vm95 = vmand %vm87, %vm91
    %vm96 = vmand %vm86, %vm92
    %vm97 = vmand %vm87, %vm93
    %vm98 = vmand %vm88, %vm90
    %vm99 = vmand %vm89, %vm91
    %vm100 = vmand %vm88, %vm92
    %vm101 = vmand %vm89, %vm93
    %v104 = vunpack.c.l.s4 1983009808
    %v105 = vunpack.c.0.s8 %v104
    %v106 = vlaneseq
    %v107 = vshrl.u32 %v106, 7
    %v108 = vsub.s32 %v105, %v107
    %v109 = vrot.slane %v70, %v108
    %v110 = vcombine.high %v109, %v109
    %113 = vrot.lane.b32.xlu0 %v109, 17
    %v114 = vpop.permute.xlu0 %113
    %115 = vrot.lane.b32.xlu0 %v110, 17
    %v116 = vpop.permute.xlu0 %115
    %vm117 = vcmp.lt.s32.totalorder %v72, 17
    %v118 = vsel %vm117, %v114, %v116
    %v119 = vsel %vm117, %v116, %v114
    %v120 = vsel %vm94, 1, 0
    %v121 = vsel %vm95, 1, 0
    %vm122 = vcmp.eq.s32.totalorder %v120, 1
    %vm123 = vcmp.eq.s32.totalorder %v121, 1
    %v124 = vsel %vm122, %v119, 0.0
    %v125 = vsel %vm123, %v118, 0.0
    %126 = vrot.lane.b32.xlu0 %v109, 16
    %v127 = vpop.permute.xlu0 %126
    %128 = vrot.lane.b32.xlu0 %v110, 16
    %v129 = vpop.permute.xlu0 %128
    %vm130 = vcmp.lt.s32.totalorder %v72, 16
    %v131 = vsel %vm130, %v127, %v129
    %v132 = vsel %vm130, %v129, %v127
    %v133 = vsel %vm86, 1, 0
    %v134 = vsel %vm87, 1, 0
    %vm135 = vcmp.eq.s32.totalorder %v133, 1
    %vm136 = vcmp.eq.s32.totalorder %v134, 1
    %v137 = vsel %vm135, %v132, 0.0
    %v138 = vsel %vm136, %v131, 0.0
    %139 = vrot.lane.b32.xlu0 %v109, 15
    %v140 = vpop.permute.xlu0 %139
    %141 = vrot.lane.b32.xlu0 %v110, 15
    %v142 = vpop.permute.xlu0 %141
    %vm143 = vcmp.lt.s32.totalorder %v72, 15
    %v144 = vsel %vm143, %v140, %v142
    %v145 = vsel %vm143, %v142, %v140
    %v146 = vsel %vm96, 1, 0
    %v147 = vsel %vm97, 1, 0
    %vm148 = vcmp.eq.s32.totalorder %v146, 1
    %vm149 = vcmp.eq.s32.totalorder %v147, 1
    %v150 = vsel %vm148, %v145, 0.0
    %v151 = vsel %vm149, %v144, 0.0
    %152 = vrot.lane.b32.xlu0 %v109, 1
    %v153 = vpop.permute.xlu0 %152
    %154 = vrot.lane.b32.xlu0 %v110, 1
    %v155 = vpop.permute.xlu0 %154
    %vm156 = vcmp.lt.s32.totalorder %v72, 1
    %v157 = vsel %vm156, %v153, %v155
    %v158 = vsel %vm156, %v155, %v153
    %v159 = vsel %vm90, 1, 0
    %v160 = vsel %vm91, 1, 0
    %vm161 = vcmp.eq.s32.totalorder %v159, 1
    %vm162 = vcmp.eq.s32.totalorder %v160, 1
    %v163 = vsel %vm161, %v158, 0.0
    %v164 = vsel %vm162, %v157, 0.0
    %165 = vrot.lane.b32.xlu0 %v109, 127
    %v166 = vpop.permute.xlu0 %165
    %167 = vrot.lane.b32.xlu0 %v110, 127
    %v168 = vpop.permute.xlu0 %167
    %vm169 = vcmp.lt.s32.totalorder %v72, 127
    %v170 = vsel %vm169, %v166, %v168
    %v171 = vsel %vm169, %v168, %v166
    %v172 = vsel %vm92, 1, 0
    %v173 = vsel %vm93, 1, 0
    %vm174 = vcmp.eq.s32.totalorder %v172, 1
    %vm175 = vcmp.eq.s32.totalorder %v173, 1
    %v176 = vsel %vm174, %v170, 0.0
    %v177 = vsel %vm175, %v171, 0.0
    %178 = vrot.lane.b32.xlu0 %v109, 113
    %v179 = vpop.permute.xlu0 %178
    %180 = vrot.lane.b32.xlu0 %v110, 113
    %v181 = vpop.permute.xlu0 %180
    %vm182 = vcmp.lt.s32.totalorder %v72, 113
    %v183 = vsel %vm182, %v179, %v181
    %v184 = vsel %vm182, %v181, %v179
    %v185 = vsel %vm98, 1, 0
    %v186 = vsel %vm99, 1, 0
    %vm187 = vcmp.eq.s32.totalorder %v185, 1
    %vm188 = vcmp.eq.s32.totalorder %v186, 1
    %v189 = vsel %vm187, %v183, 0.0
    %v190 = vsel %vm188, %v184, 0.0
    %191 = vrot.lane.b32.xlu0 %v109, 112
    %v192 = vpop.permute.xlu0 %191
    %193 = vrot.lane.b32.xlu0 %v110, 112
    %v194 = vpop.permute.xlu0 %193
    %vm195 = vcmp.lt.s32.totalorder %v72, 112
    %v196 = vsel %vm195, %v192, %v194
    %v197 = vsel %vm195, %v194, %v192
    %v198 = vsel %vm88, 1, 0
    %v199 = vsel %vm89, 1, 0
    %vm200 = vcmp.eq.s32.totalorder %v198, 1
    %vm201 = vcmp.eq.s32.totalorder %v199, 1
    %v202 = vsel %vm200, %v196, 0.0
    %v203 = vsel %vm201, %v197, 0.0
    %204 = vrot.lane.b32.xlu0 %v109, 111
    %v205 = vpop.permute.xlu0 %204
    %206 = vrot.lane.b32.xlu0 %v110, 111
    %v207 = vpop.permute.xlu0 %206
    %vm208 = vcmp.lt.s32.totalorder %v72, 111
    %v209 = vsel %vm208, %v205, %v207
    %v210 = vsel %vm208, %v207, %v205
    %v211 = vsel %vm100, 1, 0
    %v212 = vsel %vm101, 1, 0
    %vm213 = vcmp.eq.s32.totalorder %v211, 1
    %vm214 = vcmp.eq.s32.totalorder %v212, 1
    %v215 = vsel %vm213, %v209, 0.0
    %v216 = vsel %vm214, %v210, 0.0
    %s217 = sld [smem:[#allocation2]]
    %v218 = vstv %s217
    %s219 = sld [smem:[#allocation7]]
    %v220 = vstv %s219
    %v221 = vmul.f32 %v124, %v220
    %v222 = vmul.f32 %v125, %v220
    %s223 = sld [smem:[#allocation7 + $0x1]]
    %v224 = vstv %s223
    %v225 = vmul.f32 %v137, %v224
    %v226 = vmul.f32 %v138, %v224
    %v227 = vadd.f32 %v221, %v225
    %v228 = vadd.f32 %v222, %v226
    %s229 = sld [smem:[#allocation7 + $0x2]]
    %v230 = vstv %s229
    %v231 = vmul.f32 %v150, %v230
    %v232 = vmul.f32 %v151, %v230
    %v233 = vadd.f32 %v227, %v231
    %v234 = vadd.f32 %v228, %v232
    %s235 = sld [smem:[#allocation7 + $0x3]]
    %v236 = vstv %s235
    %v237 = vmul.f32 %v163, %v236
    %v238 = vmul.f32 %v164, %v236
    %v239 = vadd.f32 %v233, %v237
    %v240 = vadd.f32 %v234, %v238
    %s241 = sld [smem:[#allocation7 + $0x4]]
    %v242 = vstv %s241
    %v243 = vmul.f32 %v70, %v242
    %v246 = vunpack.c.l.s4 1983009808
    %v247 = vunpack.c.0.s8 %v246
    %v248 = vlaneseq
    %v249 = vshrl.u32 %v248, 7
    %v250 = vsub.s32 %v247, %v249
    %v251 = vrot.slane %v243, %v250
    %v252 = vcombine.high %v251, %v251
    %v255 = vadd.f32 %v239, %v251
    %v256 = vadd.f32 %v240, %v252
    %s257 = sld [smem:[#allocation7 + $0x5]]
    %v258 = vstv %s257
    %v259 = vmul.f32 %v176, %v258
    %v260 = vmul.f32 %v177, %v258
    %v261 = vadd.f32 %v255, %v259
    %v262 = vadd.f32 %v256, %v260
    %s263 = sld [smem:[#allocation7 + $0x6]]
    %v264 = vstv %s263
    %v265 = vmul.f32 %v189, %v264
    %v266 = vmul.f32 %v190, %v264
    %v267 = vadd.f32 %v261, %v265
    %v268 = vadd.f32 %v262, %v266
    %s269 = sld [smem:[#allocation7 + $0x7]]
    %v270 = vstv %s269
    %v271 = vmul.f32 %v202, %v270
    %v272 = vmul.f32 %v203, %v270
    %v273 = vadd.f32 %v267, %v271
    %v274 = vadd.f32 %v268, %v272
    %s275 = sld [smem:[#allocation7 + $0x8]]
    %v276 = vstv %s275
    %v277 = vmul.f32 %v215, %v276
    %v278 = vmul.f32 %v216, %v276
    %v279 = vadd.f32 %v273, %v277
    %v280 = vadd.f32 %v274, %v278
    %s281 = sld [smem:[#allocation8]]
    %v282 = vstv %s281
    %v283 = vadd.f32 %v279, %v282
    %v284 = vadd.f32 %v280, %v282
    %v285 = vmax.f32 %v283, 0.0
    %v286 = vmax.f32 %v284, 0.0
    %287 = vrot.lane.b32.xlu0 %v285, 112
    %v288 = vpop.permute.xlu0 %287
    %289 = vrot.lane.b32.xlu0 %v286, 112
    %v290 = vpop.permute.xlu0 %289
    %v291 = vsel %vm195, %v288, %v290
    %v292 = vsel %vm195, %v290, %v288
    %293 = vrot.lane.b32.xlu0 %v285, 16
    %v294 = vpop.permute.xlu0 %293
    %295 = vrot.lane.b32.xlu0 %v286, 16
    %v296 = vpop.permute.xlu0 %295
    %v297 = vsel %vm130, %v294, %v296
    %v298 = vsel %vm130, %v296, %v294
    %v299 = vsel %vm80, 1, 0
    %v300 = vsel %vm81, 1, 0
    %vm301 = vcmp.eq.s32.totalorder %v299, 1
    %vm302 = vcmp.eq.s32.totalorder %v300, 1
    %v303 = vsel %vm301, %v298, %v291
    %v304 = vsel %vm302, %v297, %v292
    %v305 = vmax.f32 %v285, %v303
    %v306 = vmax.f32 %v286, %v304
    %307 = vrot.lane.b32.xlu0 %v305, 127
    %v308 = vpop.permute.xlu0 %307
    %309 = vrot.lane.b32.xlu0 %v306, 127
    %v310 = vpop.permute.xlu0 %309
    %v311 = vsel %vm169, %v308, %v310
    %v312 = vsel %vm169, %v310, %v308
    %313 = vrot.lane.b32.xlu0 %v305, 1
    %v314 = vpop.permute.xlu0 %313
    %315 = vrot.lane.b32.xlu0 %v306, 1
    %v316 = vpop.permute.xlu0 %315
    %v317 = vsel %vm156, %v314, %v316
    %v318 = vsel %vm156, %v316, %v314
    %v319 = vsel %vm84, 1, 0
    %v320 = vsel %vm85, 1, 0
    %vm321 = vcmp.eq.s32.totalorder %v319, 1
    %vm322 = vcmp.eq.s32.totalorder %v320, 1
    %v323 = vsel %vm321, %v318, %v311
    %v324 = vsel %vm322, %v317, %v312
    %v325 = vmax.f32 %v305, %v323
    %v326 = vmax.f32 %v306, %v324
    %s327 = sld [smem:[#allocation10]]
    %s328 = sld [smem:[#allocation10 + $0x1]]
    %s329 = sld [smem:[#allocation10 + $0x2]]
    %s330 = sld [smem:[#allocation10 + $0x3]]
    %v331 = vstv %s330
    %v332 = vstv %s329
    %v333 = vsel %vm84, %v331, %v332
    %v334 = vsel %vm85, %v331, %v332
    %v335 = vstv %s328
    %v336 = vstv %s327
    %v337 = vsel %vm84, %v335, %v336
    %v338 = vsel %vm85, %v335, %v336
    %v339 = vsel %vm80, %v333, %v337
    %v340 = vsel %vm81, %v334, %v338
    %v341 = vmul.f32 %v325, %v339
    %v342 = vmul.f32 %v326, %v340
    %v343 = vadd.f32 %v218, %v341
    %v344 = vadd.f32 %v218, %v342
    %s345 = sld [smem:[#allocation7 + $0x9]]
    %v346 = vstv %s345
    %v347 = vmul.f32 %v124, %v346
    %v348 = vmul.f32 %v125, %v346
    %s349 = sld [smem:[#allocation7 + $0xa]]
    %v350 = vstv %s349
    %v351 = vmul.f32 %v137, %v350
    %v352 = vmul.f32 %v138, %v350
    %v353 = vadd.f32 %v347, %v351
    %v354 = vadd.f32 %v348, %v352
    %s355 = sld [smem:[#allocation7 + $0xb]]
    %v356 = vstv %s355
    %v357 = vmul.f32 %v150, %v356
    %v358 = vmul.f32 %v151, %v356
    %v359 = vadd.f32 %v353, %v357
    %v360 = vadd.f32 %v354, %v358
    %s361 = sld [smem:[#allocation7 + $0xc]]
    %v362 = vstv %s361
    %v363 = vmul.f32 %v163, %v362
    %v364 = vmul.f32 %v164, %v362
    %v365 = vadd.f32 %v359, %v363
    %v366 = vadd.f32 %v360, %v364
    %s367 = sld [smem:[#allocation7 + $0xd]]
    %v368 = vstv %s367
    %v369 = vmul.f32 %v70, %v368
    %v372 = vunpack.c.l.s4 1983009808
    %v373 = vunpack.c.0.s8 %v372
    %v374 = vlaneseq
    %v375 = vshrl.u32 %v374, 7
    %v376 = vsub.s32 %v373, %v375
    %v377 = vrot.slane %v369, %v376
    %v378 = vcombine.high %v377, %v377
    %v381 = vadd.f32 %v365, %v377
    %v382 = vadd.f32 %v366, %v378
    %s383 = sld [smem:[#allocation7 + $0xe]]
    %v384 = vstv %s383
    %v385 = vmul.f32 %v176, %v384
    %v386 = vmul.f32 %v177, %v384
    %v387 = vadd.f32 %v381, %v385
    %v388 = vadd.f32 %v382, %v386
    %s389 = sld [smem:[#allocation7 + $0xf]]
    %v390 = vstv %s389
    %v391 = vmul.f32 %v189, %v390
    %v392 = vmul.f32 %v190, %v390
    %v393 = vadd.f32 %v387, %v391
    %v394 = vadd.f32 %v388, %v392
    %s395 = sld [smem:[#allocation7 + $0x10]]
    %v396 = vstv %s395
    %v397 = vmul.f32 %v202, %v396
    %v398 = vmul.f32 %v203, %v396
    %v399 = vadd.f32 %v393, %v397
    %v400 = vadd.f32 %v394, %v398
    %s401 = sld [smem:[#allocation7 + $0x11]]
    %v402 = vstv %s401
    %v403 = vmul.f32 %v215, %v402
    %v404 = vmul.f32 %v216, %v402
    %v405 = vadd.f32 %v399, %v403
    %v406 = vadd.f32 %v400, %v404
    %s407 = sld [smem:[#allocation8 + $0x1]]
    %v408 = vstv %s407
    %v409 = vadd.f32 %v405, %v408
    %v410 = vadd.f32 %v406, %v408
    %v411 = vmax.f32 %v409, 0.0
    %v412 = vmax.f32 %v410, 0.0
    %413 = vrot.lane.b32.xlu0 %v411, 112
    %v414 = vpop.permute.xlu0 %413
    %415 = vrot.lane.b32.xlu0 %v412, 112
    %v416 = vpop.permute.xlu0 %415
    %v417 = vsel %vm195, %v414, %v416
    %v418 = vsel %vm195, %v416, %v414
    %419 = vrot.lane.b32.xlu0 %v411, 16
    %v420 = vpop.permute.xlu0 %419
    %421 = vrot.lane.b32.xlu0 %v412, 16
    %v422 = vpop.permute.xlu0 %421
    %v423 = vsel %vm130, %v420, %v422
    %v424 = vsel %vm130, %v422, %v420
    %v425 = vsel %vm301, %v424, %v417
    %v426 = vsel %vm302, %v423, %v418
    %v427 = vmax.f32 %v411, %v425
    %v428 = vmax.f32 %v412, %v426
    %429 = vrot.lane.b32.xlu0 %v427, 127
    %v430 = vpop.permute.xlu0 %429
    %431 = vrot.lane.b32.xlu0 %v428, 127
    %v432 = vpop.permute.xlu0 %431
    %v433 = vsel %vm169, %v430, %v432
    %v434 = vsel %vm169, %v432, %v430
    %435 = vrot.lane.b32.xlu0 %v427, 1
    %v436 = vpop.permute.xlu0 %435
    %437 = vrot.lane.b32.xlu0 %v428, 1
    %v438 = vpop.permute.xlu0 %437
    %v439 = vsel %vm156, %v436, %v438
    %v440 = vsel %vm156, %v438, %v436
    %v441 = vsel %vm321, %v440, %v433
    %v442 = vsel %vm322, %v439, %v434
    %v443 = vmax.f32 %v427, %v441
    %v444 = vmax.f32 %v428, %v442
    %s445 = sld [smem:[#allocation10 + $0x4]]
    %s446 = sld [smem:[#allocation10 + $0x5]]
    %s447 = sld [smem:[#allocation10 + $0x6]]
    %s448 = sld [smem:[#allocation10 + $0x7]]
    %v449 = vstv %s448
    %v450 = vstv %s447
    %v451 = vsel %vm84, %v449, %v450
    %v452 = vsel %vm85, %v449, %v450
    %v453 = vstv %s446
    %v454 = vstv %s445
    %v455 = vsel %vm84, %v453, %v454
    %v456 = vsel %vm85, %v453, %v454
    %v457 = vsel %vm80, %v451, %v455
    %v458 = vsel %vm81, %v452, %v456
    %v459 = vmul.f32 %v443, %v457
    %v460 = vmul.f32 %v444, %v458
    %v461 = vadd.f32 %v343, %v459
    %v462 = vadd.f32 %v344, %v460
    %s463 = sld [smem:[#allocation7 + $0x12]]
    %v464 = vstv %s463
    %v465 = vmul.f32 %v124, %v464
    %v466 = vmul.f32 %v125, %v464
    %s467 = sld [smem:[#allocation7 + $0x13]]
    %v468 = vstv %s467
    %v469 = vmul.f32 %v137, %v468
    %v470 = vmul.f32 %v138, %v468
    %v471 = vadd.f32 %v465, %v469
    %v472 = vadd.f32 %v466, %v470
    %s473 = sld [smem:[#allocation7 + $0x14]]
    %v474 = vstv %s473
    %v475 = vmul.f32 %v150, %v474
    %v476 = vmul.f32 %v151, %v474
    %v477 = vadd.f32 %v471, %v475
    %v478 = vadd.f32 %v472, %v476
    %s479 = sld [smem:[#allocation7 + $0x15]]
    %v480 = vstv %s479
    %v481 = vmul.f32 %v163, %v480
    %v482 = vmul.f32 %v164, %v480
    %v483 = vadd.f32 %v477, %v481
    %v484 = vadd.f32 %v478, %v482
    %s485 = sld [smem:[#allocation7 + $0x16]]
    %v486 = vstv %s485
    %v487 = vmul.f32 %v70, %v486
    %v490 = vunpack.c.l.s4 1983009808
    %v491 = vunpack.c.0.s8 %v490
    %v492 = vlaneseq
    %v493 = vshrl.u32 %v492, 7
    %v494 = vsub.s32 %v491, %v493
    %v495 = vrot.slane %v487, %v494
    %v496 = vcombine.high %v495, %v495
    %v499 = vadd.f32 %v483, %v495
    %v500 = vadd.f32 %v484, %v496
    %s501 = sld [smem:[#allocation7 + $0x17]]
    %v502 = vstv %s501
    %v503 = vmul.f32 %v176, %v502
    %v504 = vmul.f32 %v177, %v502
    %v505 = vadd.f32 %v499, %v503
    %v506 = vadd.f32 %v500, %v504
    %s507 = sld [smem:[#allocation7 + $0x18]]
    %v508 = vstv %s507
    %v509 = vmul.f32 %v189, %v508
    %v510 = vmul.f32 %v190, %v508
    %v511 = vadd.f32 %v505, %v509
    %v512 = vadd.f32 %v506, %v510
    %s513 = sld [smem:[#allocation7 + $0x19]]
    %v514 = vstv %s513
    %v515 = vmul.f32 %v202, %v514
    %v516 = vmul.f32 %v203, %v514
    %v517 = vadd.f32 %v511, %v515
    %v518 = vadd.f32 %v512, %v516
    %s519 = sld [smem:[#allocation7 + $0x1a]]
    %v520 = vstv %s519
    %v521 = vmul.f32 %v215, %v520
    %v522 = vmul.f32 %v216, %v520
    %v523 = vadd.f32 %v517, %v521
    %v524 = vadd.f32 %v518, %v522
    %s525 = sld [smem:[#allocation8 + $0x2]]
    %v526 = vstv %s525
    %v527 = vadd.f32 %v523, %v526
    %v528 = vadd.f32 %v524, %v526
    %v529 = vmax.f32 %v527, 0.0
    %v530 = vmax.f32 %v528, 0.0
    %531 = vrot.lane.b32.xlu0 %v529, 112
    %v532 = vpop.permute.xlu0 %531
    %533 = vrot.lane.b32.xlu0 %v530, 112
    %v534 = vpop.permute.xlu0 %533
    %v535 = vsel %vm195, %v532, %v534
    %v536 = vsel %vm195, %v534, %v532
    %537 = vrot.lane.b32.xlu0 %v529, 16
    %v538 = vpop.permute.xlu0 %537
    %539 = vrot.lane.b32.xlu0 %v530, 16
    %v540 = vpop.permute.xlu0 %539
    %v541 = vsel %vm130, %v538, %v540
    %v542 = vsel %vm130, %v540, %v538
    %v543 = vsel %vm301, %v542, %v535
    %v544 = vsel %vm302, %v541, %v536
    %v545 = vmax.f32 %v529, %v543
    %v546 = vmax.f32 %v530, %v544
    %547 = vrot.lane.b32.xlu0 %v545, 127
    %v548 = vpop.permute.xlu0 %547
    %549 = vrot.lane.b32.xlu0 %v546, 127
    %v550 = vpop.permute.xlu0 %549
    %v551 = vsel %vm169, %v548, %v550
    %v552 = vsel %vm169, %v550, %v548
    %553 = vrot.lane.b32.xlu0 %v545, 1
    %v554 = vpop.permute.xlu0 %553
    %555 = vrot.lane.b32.xlu0 %v546, 1
    %v556 = vpop.permute.xlu0 %555
    %v557 = vsel %vm156, %v554, %v556
    %v558 = vsel %vm156, %v556, %v554
    %v559 = vsel %vm321, %v558, %v551
    %v560 = vsel %vm322, %v557, %v552
    %v561 = vmax.f32 %v545, %v559
    %v562 = vmax.f32 %v546, %v560
    %s563 = sld [smem:[#allocation10 + $0x8]]
    %s564 = sld [smem:[#allocation10 + $0x9]]
    %s565 = sld [smem:[#allocation10 + $0xa]]
    %s566 = sld [smem:[#allocation10 + $0xb]]
    %v567 = vstv %s566
    %v568 = vstv %s565
    %v569 = vsel %vm84, %v567, %v568
    %v570 = vsel %vm85, %v567, %v568
    %v571 = vstv %s564
    %v572 = vstv %s563
    %v573 = vsel %vm84, %v571, %v572
    %v574 = vsel %vm85, %v571, %v572
    %v575 = vsel %vm80, %v569, %v573
    %v576 = vsel %vm81, %v570, %v574
    %v577 = vmul.f32 %v561, %v575
    %v578 = vmul.f32 %v562, %v576
    %v579 = vadd.f32 %v461, %v577
    %v580 = vadd.f32 %v462, %v578
    %s581 = sld [smem:[#allocation7 + $0x1b]]
    %v582 = vstv %s581
    %v583 = vmul.f32 %v124, %v582
    %v584 = vmul.f32 %v125, %v582
    %s585 = sld [smem:[#allocation7 + $0x1c]]
    %v586 = vstv %s585
    %v587 = vmul.f32 %v137, %v586
    %v588 = vmul.f32 %v138, %v586
    %v589 = vadd.f32 %v583, %v587
    %v590 = vadd.f32 %v584, %v588
    %s591 = sld [smem:[#allocation7 + $0x1d]]
    %v592 = vstv %s591
    %v593 = vmul.f32 %v150, %v592
    %v594 = vmul.f32 %v151, %v592
    %v595 = vadd.f32 %v589, %v593
    %v596 = vadd.f32 %v590, %v594
    %s597 = sld [smem:[#allocation7 + $0x1e]]
    %v598 = vstv %s597
    %v599 = vmul.f32 %v163, %v598
    %v600 = vmul.f32 %v164, %v598
    %v601 = vadd.f32 %v595, %v599
    %v602 = vadd.f32 %v596, %v600
    %s603 = sld [smem:[#allocation7 + $0x1f]]
    %v604 = vstv %s603
    %v605 = vmul.f32 %v70, %v604
    %v608 = vunpack.c.l.s4 1983009808
    %v609 = vunpack.c.0.s8 %v608
    %v610 = vlaneseq
    %v611 = vshrl.u32 %v610, 7
    %v612 = vsub.s32 %v609, %v611
    %v613 = vrot.slane %v605, %v612
    %v614 = vcombine.high %v613, %v613
    %v617 = vadd.f32 %v601, %v613
    %v618 = vadd.f32 %v602, %v614
    %s619 = sld [smem:[#allocation7 + $0x20]]
    %v620 = vstv %s619
    %v621 = vmul.f32 %v176, %v620
    %v622 = vmul.f32 %v177, %v620
    %v623 = vadd.f32 %v617, %v621
    %v624 = vadd.f32 %v618, %v622
    %s625 = sld [smem:[#allocation7 + $0x21]]
    %v626 = vstv %s625
    %v627 = vmul.f32 %v189, %v626
    %v628 = vmul.f32 %v190, %v626
    %v629 = vadd.f32 %v623, %v627
    %v630 = vadd.f32 %v624, %v628
    %s631 = sld [smem:[#allocation7 + $0x22]]
    %v632 = vstv %s631
    %v633 = vmul.f32 %v202, %v632
    %v634 = vmul.f32 %v203, %v632
    %v635 = vadd.f32 %v629, %v633
    %v636 = vadd.f32 %v630, %v634
    %s637 = sld [smem:[#allocation7 + $0x23]]
    %v638 = vstv %s637
    %v639 = vmul.f32 %v215, %v638
    %v640 = vmul.f32 %v216, %v638
    %v641 = vadd.f32 %v635, %v639
    %v642 = vadd.f32 %v636, %v640
    %s643 = sld [smem:[#allocation8 + $0x3]]
    %v644 = vstv %s643
    %v645 = vadd.f32 %v641, %v644
    %v646 = vadd.f32 %v642, %v644
    %v647 = vmax.f32 %v645, 0.0
    %v648 = vmax.f32 %v646, 0.0
    %649 = vrot.lane.b32.xlu0 %v647, 112
    %v650 = vpop.permute.xlu0 %649
    %651 = vrot.lane.b32.xlu0 %v648, 112
    %v652 = vpop.permute.xlu0 %651
    %v653 = vsel %vm195, %v650, %v652
    %v654 = vsel %vm195, %v652, %v650
    %655 = vrot.lane.b32.xlu0 %v647, 16
    %v656 = vpop.permute.xlu0 %655
    %657 = vrot.lane.b32.xlu0 %v648, 16
    %v658 = vpop.permute.xlu0 %657
    %v659 = vsel %vm130, %v656, %v658
    %v660 = vsel %vm130, %v658, %v656
    %v661 = vsel %vm301, %v660, %v653
    %v662 = vsel %vm302, %v659, %v654
    %v663 = vmax.f32 %v647, %v661
    %v664 = vmax.f32 %v648, %v662
    %665 = vrot.lane.b32.xlu0 %v663, 127
    %v666 = vpop.permute.xlu0 %665
    %667 = vrot.lane.b32.xlu0 %v664, 127
    %v668 = vpop.permute.xlu0 %667
    %v669 = vsel %vm169, %v666, %v668
    %v670 = vsel %vm169, %v668, %v666
    %671 = vrot.lane.b32.xlu0 %v663, 1
    %v672 = vpop.permute.xlu0 %671
    %673 = vrot.lane.b32.xlu0 %v664, 1
    %v674 = vpop.permute.xlu0 %673
    %v675 = vsel %vm156, %v672, %v674
    %v676 = vsel %vm156, %v674, %v672
    %v677 = vsel %vm321, %v676, %v669
    %v678 = vsel %vm322, %v675, %v670
    %v679 = vmax.f32 %v663, %v677
    %v680 = vmax.f32 %v664, %v678
    %s681 = sld [smem:[#allocation10 + $0xc]]
    %s682 = sld [smem:[#allocation10 + $0xd]]
    %s683 = sld [smem:[#allocation10 + $0xe]]
    %s684 = sld [smem:[#allocation10 + $0xf]]
    %v685 = vstv %s684
    %v686 = vstv %s683
    %v687 = vsel %vm84, %v685, %v686
    %v688 = vsel %vm85, %v685, %v686
    %v689 = vstv %s682
    %v690 = vstv %s681
    %v691 = vsel %vm84, %v689, %v690
    %v692 = vsel %vm85, %v689, %v690
    %v693 = vsel %vm80, %v687, %v691
    %v694 = vsel %vm81, %v688, %v692
    %v695 = vmul.f32 %v679, %v693
    %v696 = vmul.f32 %v680, %v694
    %v697 = vadd.f32 %v579, %v695
    %v698 = vadd.f32 %v580, %v696
    %v699 = vxor.u32 %v697, 2147483648
    %v700 = vxor.u32 %v698, 2147483648
    %v701 = vmul.f32 %v699, 1.442695
    %v702 = vpow.pop %v701
    %v703 = vmul.f32 %v700, 1.442695
    %v704 = vpow.pop %v703
    %v705 = vadd.f32 %v702, 1.0
    %v706 = vadd.f32 %v704, 1.0
    %v707 = vrcp.pop %v705
    %v708 = vmul.f32 1.0, %v707
    %v709 = vrcp.pop %v706
    %v710 = vmul.f32 1.0, %v709
    %v713 = vcombine.low %v708, %v710
    %v715 = vunpack.c.l.s4 1983009808
    %v716 = vunpack.c.0.s8 %v715
    %v717 = vlaneseq
    %v718 = vshrl.u32 %v717, 7
    %v719 = vsub.s32 %v716, %v718
    %v720 = vrot.slane %v713, %v719
    %722 = vst [vmem:[#allocation11] sm:$0xf] %v720
    // Predicated region
    $region38: #{tpu_custom_call.1} parent=1 // pred_check
      _
    $region39: #{tpu_custom_call.1} parent=1 // pred_check_branch
      %724 = sbr.rel (0) target = $region41
    $region40: #{tpu_custom_call.1} parent=1 // pred_region
      %s726 = ssub.s32 64, 64
      %727 = vsyncadd [#allocation5], %s726
      %s729 = sshll.u32 [#allocation11], 4
      %s730 = int_to_ptr.vmem [resolvable:$true] %s729
      %732 = dma.vmem_to_hbm [thread:$0]  %s730, 64, %s5, [#allocation5]
    $region41: #{tpu_custom_call.1} parent=1 // pred_fallthru
      _
    // Predicated region
    $region42: #{tpu_custom_call.1} parent=1 // pred_check
      _
    $region43: #{tpu_custom_call.1} parent=1 // pred_check_branch
      %734 = sbr.rel (0) target = $region45
    $region44: #{tpu_custom_call.1} parent=1 // pred_region
      %735 = dma.done [#allocation5], 64
    $region45: #{tpu_custom_call.1} parent=1 // pred_fallthru
      _
    %736 = vsyncpa [#allocation4], 1
    %737 = vsyncpa [#allocation5], 1
    %738 = vsyncpa [#allocation6], 1
    %739 = vsyncpa [#allocation9], 1

</llo_original>
